<compile_context>
chip_gen: v7x
topology: tpu7x:2x2x1
jax: 0.10.0
libtpu: 0.0.40
codegen_flags: <defaults>
</compile_context>

<pallas_src>
import jax
import jax.numpy as jnp
from jax import lax
from jax.experimental import pallas as pl
from jax.experimental.pallas import tpu as pltpu

PAD = 2


def conv_silu(x_nchw, weight, *, b_tile=None):
    """SiLU(conv2d(x, w, stride=1, padding=2, bias=None)).

    x_nchw: (N, 1, H, W) f32;  weight: (OC, 1, KH, KW) f32.
    Returns (N, OC, H + 2*PAD - KH + 1, W + 2*PAD - KW + 1) f32.
    """
    N, CIN, H, W = x_nchw.shape
    assert CIN == 1, "module has a single input channel"
    OC, _, KH, KW = weight.shape

    HP, WP = H + 2 * PAD, W + 2 * PAD          # padded spatial dims (20, 20)
    HO, WO = HP - KH + 1, WP - KW + 1          # conv output dims    (18, 18)
    KHW = KH * KW

    # Lane-dense flat layouts:
    #   input : one padded image flattened to FLAT_IN lanes (128-aligned)
    #   output: (OC, HO*WP) per image; the 2 junk 'pad' columns per row are
    #           dropped by a cheap wrapper slice.
    FLAT_OUT = HO * WP                          # 360
    max_shift = (KH - 1) * WP + (KW - 1)        # 42 = largest tap offset
    flat_need = max(HP * WP, max_shift + FLAT_OUT)
    FLAT_IN = ((flat_need + 127) // 128) * 128  # 512 -> 4 full lane tiles

    if b_tile is None:
        # Keep >=2 grid steps when N>1 (feeds both v7x TensorCores); cap the
        # block so huge batches still fit comfortably in VMEM.
        b_tile = min(128, pl.cdiv(N, 2)) if N > 1 else 1
    n_pad = pl.cdiv(N, b_tile) * b_tile

    # Wrapper-side zero padding + flatten (free-ish HBM ops; removes the
    # per-step in-kernel padding roundtrip).
    x = x_nchw[:, 0, :, :].astype(jnp.float32)
    xp = jnp.pad(x, ((0, n_pad - N), (PAD, PAD), (PAD, PAD)))    # (n_pad, HP, WP)
    xflat = xp.reshape(n_pad, HP * WP)
    xflat = jnp.pad(xflat, ((0, 0), (0, FLAT_IN - HP * WP)))     # (n_pad, FLAT_IN)
    xflat = xflat[:, None, :]                                    # (n_pad, 1, FLAT_IN)

    # 27 scalar weights (oc-major) for SMEM scalar indexing.
    w_flat = weight.reshape(OC * KHW).astype(jnp.float32)

    def kernel(w_ref, x_ref, o_ref):
        xall = x_ref[...]                                  # (b_tile, 1, FLAT_IN)
        # Tap-outer / oc-inner: one shifted window + OC accumulators live.
        accs = [None] * OC
        for t in range(KHW):
            kh, kw = divmod(t, KW)
            s = kh * WP + kw
            win = xall[:, :, s:s + FLAT_OUT]               # (b_tile, 1, FLAT_OUT)
            for oc in range(OC):
                contrib = w_ref[oc * KHW + t] * win
                accs[oc] = contrib if accs[oc] is None else accs[oc] + contrib
        for oc in range(OC):
            a = accs[oc]
            # Exact, numerically-stable sigmoid (EUP); SiLU = a * sigmoid(a).
            o_ref[:, oc:oc + 1, :] = a * jax.nn.sigmoid(a)

    out = pl.pallas_call(
        kernel,
        out_shape=jax.ShapeDtypeStruct((n_pad, OC, FLAT_OUT), jnp.float32),
        grid=(n_pad // b_tile,),
        in_specs=[
            pl.BlockSpec(memory_space=pltpu.MemorySpace.SMEM),       # 27 weights
            pl.BlockSpec((b_tile, 1, FLAT_IN), lambda n: (n, 0, 0)),  # flat images
        ],
        out_specs=pl.BlockSpec((b_tile, OC, FLAT_OUT), lambda n: (n, 0, 0)),
        compiler_params=pltpu.CompilerParams(
            dimension_semantics=("parallel",)),
    )(w_flat, xflat)

    # Free metadata reshape, then drop the 2 junk columns per row and any
    # batch padding.
    return out.reshape(n_pad, OC, HO, WP)[:N, :, :, :WO]


def reference(x_nchw, weight):
    v1 = lax.conv_general_dilated(
        x_nchw, weight,
        window_strides=(1, 1),
        padding=((PAD, PAD), (PAD, PAD)),
        dimension_numbers=("NCHW", "OIHW", "NCHW"))
    return v1 * jax.nn.sigmoid(v1)


if __name__ == "__main__":
    key = jax.random.PRNGKey(0)
    kx, kw = jax.random.split(key)

    # Small shapes consistent with the module: 1 input channel, 3 output
    # channels, 3x3 kernel; batch=4, 16x16 spatial (original fuzz: 1x1x64x64).
    N, H, W = 4, 16, 16
    x = jax.random.normal(kx, (N, 1, H, W), dtype=jnp.float32)
    fan_in = 1 * 3 * 3
    bound = 1.0 / (fan_in ** 0.5)
    w = jax.random.uniform(kw, (3, 1, 3, 3), dtype=jnp.float32,
                           minval=-bound, maxval=bound)

    out = conv_silu(x, w)            # default b_tile=2 -> grid=(2,)
    jax.block_until_ready(out)

    ref = reference(x, w)
    assert out.shape == ref.shape == (N, 3, H + 2, W + 2), out.shape
    err = float(jnp.max(jnp.abs(out - ref)))
    assert jnp.allclose(out, ref, atol=1e-4, rtol=1e-4), err

    print("KERNEL_OK")
</pallas_src>

<mosaic_0001>
module attributes {stable_mosaic.version = 11 : i64} {
  func.func @kernel(%arg0: i32, %arg1: memref<27xf32, #tpu.memory_space<smem>>, %arg2: memref<2x1x512xf32, #tpu.memory_space<vmem>>, %arg3: memref<2x3x360xf32, #tpu.memory_space<vmem>>) attributes {dimension_semantics = [#tpu.dimension_semantics<parallel>], iteration_bounds = array<i64: 2>, scalar_prefetch = 0 : i64, scratch_operands = 0 : i64, tpu.core_type = #tpu.core_type<tc>, window_params = [{transform_indices = @transform_0, window_bounds = array<i64: 27>}, {transform_indices = @transform_1, window_bounds = array<i64: 2, 1, 512>}, {transform_indices = @transform_2, window_bounds = array<i64: 2, 3, 360>}]} {
    %c0 = arith.constant 0 : index
    %c0_0 = arith.constant 0 : index
    %c0_1 = arith.constant 0 : index
    %0 = vector.load %arg2[%c0, %c0_0, %c0_1] : memref<2x1x512xf32, #tpu.memory_space<vmem>>, vector<2x1x512xf32>
    %1 = vector.extract_strided_slice %0 {offsets = [0, 0, 0], sizes = [2, 1, 360], strides = [1, 1, 1]} : vector<2x1x512xf32> to vector<2x1x360xf32>
    %c0_2 = arith.constant 0 : index
    %2 = memref.load %arg1[%c0_2] : memref<27xf32, #tpu.memory_space<smem>>
    %3 = vector.broadcast %2 : f32 to vector<2x1x360xf32>
    %4 = arith.mulf %3, %1 : vector<2x1x360xf32>
    %c9 = arith.constant 9 : index
    %5 = memref.load %arg1[%c9] : memref<27xf32, #tpu.memory_space<smem>>
    %6 = vector.broadcast %5 : f32 to vector<2x1x360xf32>
    %7 = arith.mulf %6, %1 : vector<2x1x360xf32>
    %c18 = arith.constant 18 : index
    %8 = memref.load %arg1[%c18] : memref<27xf32, #tpu.memory_space<smem>>
    %9 = vector.broadcast %8 : f32 to vector<2x1x360xf32>
    %10 = arith.mulf %9, %1 : vector<2x1x360xf32>
    %11 = vector.extract_strided_slice %0 {offsets = [0, 0, 1], sizes = [2, 1, 360], strides = [1, 1, 1]} : vector<2x1x512xf32> to vector<2x1x360xf32>
    %c1 = arith.constant 1 : index
    %12 = memref.load %arg1[%c1] : memref<27xf32, #tpu.memory_space<smem>>
    %13 = vector.broadcast %12 : f32 to vector<2x1x360xf32>
    %14 = arith.mulf %13, %11 : vector<2x1x360xf32>
    %15 = arith.addf %4, %14 : vector<2x1x360xf32>
    %c10 = arith.constant 10 : index
    %16 = memref.load %arg1[%c10] : memref<27xf32, #tpu.memory_space<smem>>
    %17 = vector.broadcast %16 : f32 to vector<2x1x360xf32>
    %18 = arith.mulf %17, %11 : vector<2x1x360xf32>
    %19 = arith.addf %7, %18 : vector<2x1x360xf32>
    %c19 = arith.constant 19 : index
    %20 = memref.load %arg1[%c19] : memref<27xf32, #tpu.memory_space<smem>>
    %21 = vector.broadcast %20 : f32 to vector<2x1x360xf32>
    %22 = arith.mulf %21, %11 : vector<2x1x360xf32>
    %23 = arith.addf %10, %22 : vector<2x1x360xf32>
    %24 = vector.extract_strided_slice %0 {offsets = [0, 0, 2], sizes = [2, 1, 360], strides = [1, 1, 1]} : vector<2x1x512xf32> to vector<2x1x360xf32>
    %c2 = arith.constant 2 : index
    %25 = memref.load %arg1[%c2] : memref<27xf32, #tpu.memory_space<smem>>
    %26 = vector.broadcast %25 : f32 to vector<2x1x360xf32>
    %27 = arith.mulf %26, %24 : vector<2x1x360xf32>
    %28 = arith.addf %15, %27 : vector<2x1x360xf32>
    %c11 = arith.constant 11 : index
    %29 = memref.load %arg1[%c11] : memref<27xf32, #tpu.memory_space<smem>>
    %30 = vector.broadcast %29 : f32 to vector<2x1x360xf32>
    %31 = arith.mulf %30, %24 : vector<2x1x360xf32>
    %32 = arith.addf %19, %31 : vector<2x1x360xf32>
    %c20 = arith.constant 20 : index
    %33 = memref.load %arg1[%c20] : memref<27xf32, #tpu.memory_space<smem>>
    %34 = vector.broadcast %33 : f32 to vector<2x1x360xf32>
    %35 = arith.mulf %34, %24 : vector<2x1x360xf32>
    %36 = arith.addf %23, %35 : vector<2x1x360xf32>
    %37 = vector.extract_strided_slice %0 {offsets = [0, 0, 20], sizes = [2, 1, 360], strides = [1, 1, 1]} : vector<2x1x512xf32> to vector<2x1x360xf32>
    %c3 = arith.constant 3 : index
    %38 = memref.load %arg1[%c3] : memref<27xf32, #tpu.memory_space<smem>>
    %39 = vector.broadcast %38 : f32 to vector<2x1x360xf32>
    %40 = arith.mulf %39, %37 : vector<2x1x360xf32>
    %41 = arith.addf %28, %40 : vector<2x1x360xf32>
    %c12 = arith.constant 12 : index
    %42 = memref.load %arg1[%c12] : memref<27xf32, #tpu.memory_space<smem>>
    %43 = vector.broadcast %42 : f32 to vector<2x1x360xf32>
    %44 = arith.mulf %43, %37 : vector<2x1x360xf32>
    %45 = arith.addf %32, %44 : vector<2x1x360xf32>
    %c21 = arith.constant 21 : index
    %46 = memref.load %arg1[%c21] : memref<27xf32, #tpu.memory_space<smem>>
    %47 = vector.broadcast %46 : f32 to vector<2x1x360xf32>
    %48 = arith.mulf %47, %37 : vector<2x1x360xf32>
    %49 = arith.addf %36, %48 : vector<2x1x360xf32>
    %50 = vector.extract_strided_slice %0 {offsets = [0, 0, 21], sizes = [2, 1, 360], strides = [1, 1, 1]} : vector<2x1x512xf32> to vector<2x1x360xf32>
    %c4 = arith.constant 4 : index
    %51 = memref.load %arg1[%c4] : memref<27xf32, #tpu.memory_space<smem>>
    %52 = vector.broadcast %51 : f32 to vector<2x1x360xf32>
    %53 = arith.mulf %52, %50 : vector<2x1x360xf32>
    %54 = arith.addf %41, %53 : vector<2x1x360xf32>
    %c13 = arith.constant 13 : index
    %55 = memref.load %arg1[%c13] : memref<27xf32, #tpu.memory_space<smem>>
    %56 = vector.broadcast %55 : f32 to vector<2x1x360xf32>
    %57 = arith.mulf %56, %50 : vector<2x1x360xf32>
    %58 = arith.addf %45, %57 : vector<2x1x360xf32>
    %c22 = arith.constant 22 : index
    %59 = memref.load %arg1[%c22] : memref<27xf32, #tpu.memory_space<smem>>
    %60 = vector.broadcast %59 : f32 to vector<2x1x360xf32>
    %61 = arith.mulf %60, %50 : vector<2x1x360xf32>
    %62 = arith.addf %49, %61 : vector<2x1x360xf32>
    %63 = vector.extract_strided_slice %0 {offsets = [0, 0, 22], sizes = [2, 1, 360], strides = [1, 1, 1]} : vector<2x1x512xf32> to vector<2x1x360xf32>
    %c5 = arith.constant 5 : index
    %64 = memref.load %arg1[%c5] : memref<27xf32, #tpu.memory_space<smem>>
    %65 = vector.broadcast %64 : f32 to vector<2x1x360xf32>
    %66 = arith.mulf %65, %63 : vector<2x1x360xf32>
    %67 = arith.addf %54, %66 : vector<2x1x360xf32>
    %c14 = arith.constant 14 : index
    %68 = memref.load %arg1[%c14] : memref<27xf32, #tpu.memory_space<smem>>
    %69 = vector.broadcast %68 : f32 to vector<2x1x360xf32>
    %70 = arith.mulf %69, %63 : vector<2x1x360xf32>
    %71 = arith.addf %58, %70 : vector<2x1x360xf32>
    %c23 = arith.constant 23 : index
    %72 = memref.load %arg1[%c23] : memref<27xf32, #tpu.memory_space<smem>>
    %73 = vector.broadcast %72 : f32 to vector<2x1x360xf32>
    %74 = arith.mulf %73, %63 : vector<2x1x360xf32>
    %75 = arith.addf %62, %74 : vector<2x1x360xf32>
    %76 = vector.extract_strided_slice %0 {offsets = [0, 0, 40], sizes = [2, 1, 360], strides = [1, 1, 1]} : vector<2x1x512xf32> to vector<2x1x360xf32>
    %c6 = arith.constant 6 : index
    %77 = memref.load %arg1[%c6] : memref<27xf32, #tpu.memory_space<smem>>
    %78 = vector.broadcast %77 : f32 to vector<2x1x360xf32>
    %79 = arith.mulf %78, %76 : vector<2x1x360xf32>
    %80 = arith.addf %67, %79 : vector<2x1x360xf32>
    %c15 = arith.constant 15 : index
    %81 = memref.load %arg1[%c15] : memref<27xf32, #tpu.memory_space<smem>>
    %82 = vector.broadcast %81 : f32 to vector<2x1x360xf32>
    %83 = arith.mulf %82, %76 : vector<2x1x360xf32>
    %84 = arith.addf %71, %83 : vector<2x1x360xf32>
    %c24 = arith.constant 24 : index
    %85 = memref.load %arg1[%c24] : memref<27xf32, #tpu.memory_space<smem>>
    %86 = vector.broadcast %85 : f32 to vector<2x1x360xf32>
    %87 = arith.mulf %86, %76 : vector<2x1x360xf32>
    %88 = arith.addf %75, %87 : vector<2x1x360xf32>
    %89 = vector.extract_strided_slice %0 {offsets = [0, 0, 41], sizes = [2, 1, 360], strides = [1, 1, 1]} : vector<2x1x512xf32> to vector<2x1x360xf32>
    %c7 = arith.constant 7 : index
    %90 = memref.load %arg1[%c7] : memref<27xf32, #tpu.memory_space<smem>>
    %91 = vector.broadcast %90 : f32 to vector<2x1x360xf32>
    %92 = arith.mulf %91, %89 : vector<2x1x360xf32>
    %93 = arith.addf %80, %92 : vector<2x1x360xf32>
    %c16 = arith.constant 16 : index
    %94 = memref.load %arg1[%c16] : memref<27xf32, #tpu.memory_space<smem>>
    %95 = vector.broadcast %94 : f32 to vector<2x1x360xf32>
    %96 = arith.mulf %95, %89 : vector<2x1x360xf32>
    %97 = arith.addf %84, %96 : vector<2x1x360xf32>
    %c25 = arith.constant 25 : index
    %98 = memref.load %arg1[%c25] : memref<27xf32, #tpu.memory_space<smem>>
    %99 = vector.broadcast %98 : f32 to vector<2x1x360xf32>
    %100 = arith.mulf %99, %89 : vector<2x1x360xf32>
    %101 = arith.addf %88, %100 : vector<2x1x360xf32>
    %102 = vector.extract_strided_slice %0 {offsets = [0, 0, 42], sizes = [2, 1, 360], strides = [1, 1, 1]} : vector<2x1x512xf32> to vector<2x1x360xf32>
    %c8 = arith.constant 8 : index
    %103 = memref.load %arg1[%c8] : memref<27xf32, #tpu.memory_space<smem>>
    %104 = vector.broadcast %103 : f32 to vector<2x1x360xf32>
    %105 = arith.mulf %104, %102 : vector<2x1x360xf32>
    %106 = arith.addf %93, %105 : vector<2x1x360xf32>
    %c17 = arith.constant 17 : index
    %107 = memref.load %arg1[%c17] : memref<27xf32, #tpu.memory_space<smem>>
    %108 = vector.broadcast %107 : f32 to vector<2x1x360xf32>
    %109 = arith.mulf %108, %102 : vector<2x1x360xf32>
    %110 = arith.addf %97, %109 : vector<2x1x360xf32>
    %c26 = arith.constant 26 : index
    %111 = memref.load %arg1[%c26] : memref<27xf32, #tpu.memory_space<smem>>
    %112 = vector.broadcast %111 : f32 to vector<2x1x360xf32>
    %113 = arith.mulf %112, %102 : vector<2x1x360xf32>
    %114 = arith.addf %101, %113 : vector<2x1x360xf32>
    %115 = arith.negf %106 : vector<2x1x360xf32>
    %116 = math.exp %115 : vector<2x1x360xf32>
    %cst = arith.constant 1.000000e+00 : f32
    %117 = vector.broadcast %cst : f32 to vector<2x1x360xf32>
    %118 = arith.addf %117, %116 : vector<2x1x360xf32>
    %119 = arith.divf %117, %118 : vector<2x1x360xf32>
    %120 = arith.mulf %106, %119 : vector<2x1x360xf32>
    %c0_3 = arith.constant 0 : index
    %c0_4 = arith.constant 0 : index
    %c0_5 = arith.constant 0 : index
    %121 = vector.load %arg3[%c0_3, %c0_4, %c0_5] : memref<2x3x360xf32, #tpu.memory_space<vmem>>, vector<2x1x360xf32>
    tpu.vector_store %arg3[%c0_3, %c0_4, %c0_5], %120 {strides = array<i32>} : memref<2x3x360xf32, #tpu.memory_space<vmem>>, vector<2x1x360xf32>,
    %122 = arith.negf %110 : vector<2x1x360xf32>
    %123 = math.exp %122 : vector<2x1x360xf32>
    %cst_6 = arith.constant 1.000000e+00 : f32
    %124 = vector.broadcast %cst_6 : f32 to vector<2x1x360xf32>
    %125 = arith.addf %124, %123 : vector<2x1x360xf32>
    %126 = arith.divf %124, %125 : vector<2x1x360xf32>
    %127 = arith.mulf %110, %126 : vector<2x1x360xf32>
    %c0_7 = arith.constant 0 : index
    %c1_8 = arith.constant 1 : index
    %c0_9 = arith.constant 0 : index
    %128 = vector.load %arg3[%c0_7, %c1_8, %c0_9] : memref<2x3x360xf32, #tpu.memory_space<vmem>>, vector<2x1x360xf32>
    tpu.vector_store %arg3[%c0_7, %c1_8, %c0_9], %127 {strides = array<i32>} : memref<2x3x360xf32, #tpu.memory_space<vmem>>, vector<2x1x360xf32>,
    %129 = arith.negf %114 : vector<2x1x360xf32>
    %130 = math.exp %129 : vector<2x1x360xf32>
    %cst_10 = arith.constant 1.000000e+00 : f32
    %131 = vector.broadcast %cst_10 : f32 to vector<2x1x360xf32>
    %132 = arith.addf %131, %130 : vector<2x1x360xf32>
    %133 = arith.divf %131, %132 : vector<2x1x360xf32>
    %134 = arith.mulf %114, %133 : vector<2x1x360xf32>
    %c0_11 = arith.constant 0 : index
    %c2_12 = arith.constant 2 : index
    %c0_13 = arith.constant 0 : index
    %135 = vector.load %arg3[%c0_11, %c2_12, %c0_13] : memref<2x3x360xf32, #tpu.memory_space<vmem>>, vector<2x1x360xf32>
    tpu.vector_store %arg3[%c0_11, %c2_12, %c0_13], %134 {strides = array<i32>} : memref<2x3x360xf32, #tpu.memory_space<vmem>>, vector<2x1x360xf32>,
    return
  }
  func.func @transform_0(%arg0: i32) -> i32 {
    %c0_i32 = arith.constant 0 : i32
    %c0_i32_0 = arith.constant 0 : i32
    return %c0_i32 : i32
  }
  func.func @transform_1(%arg0: i32) -> (i32, i32, i32) {
    %c0_i32 = arith.constant 0 : i32
    %c0_i32_0 = arith.constant 0 : i32
    %c0_i32_1 = arith.constant 0 : i32
    return %arg0, %c0_i32, %c0_i32_0 : i32, i32, i32
  }
  func.func @transform_2(%arg0: i32) -> (i32, i32, i32) {
    %c0_i32 = arith.constant 0 : i32
    %c0_i32_0 = arith.constant 0 : i32
    %c0_i32_1 = arith.constant 0 : i32
    return %arg0, %c0_i32, %c0_i32_0 : i32, i32, i32
  }
}

</mosaic_0001>

<llo_original>
// kernel: tpu_custom_call.1
$region0: #{tpu_custom_call.1}
  #allocation0 [shape = 'u32[]', space=smem, size = 0x4, offset = 0x4, fixed_abs, tag = 'smem constant byte address 0x4 - core index']
  #allocation1 [shape = 'u32[144,128]{1,0:T(1,128)}', space=vmem, size = 0x12000, scoped, tag = 'internal scratch']
  %s0 = inlined_call_operand.hbm [shape: f32[27], index: 0, kind: input, shape index: {}]
  %s1 = inlined_call_operand.hbm [shape: f32[4,1,512], index: 1, kind: input, shape index: {}]
  %s2 = inlined_call_operand.vmem [shape: f32[4,3,360], index: 2, kind: output, shape index: {}]
  %s3 = sld [smem:[#allocation0]]
  $region49: #{tpu_custom_call.1} parent=0
    _
  %s5 = ssub.s32 1, %s3
  %s6 = scalar_select 0, %s5, %s3
  $region1: #{tpu_custom_call.1} parent=0
    #allocation2 [shape = 'u8[512]{0}', space=smem, size = 0x200, scoped, tag = 'input window, operand 0, single buffered']
    #allocation3 [shape = 's32[2]{0}', space=sflag, size = 0x8, scoped, tag = 'scoped memory for tpu_custom_call.1']
    #allocation4 [shape = 's32[2]{0}', space=sflag, size = 0x8, scoped, tag = 'scoped memory for tpu_custom_call.1']
    #allocation5 [shape = 'u8[8192]{0}', space=vmem, size = 0x2000, scoped, tag = 'input window, operand 1']
    %7 = vsyncpa [#allocation4], 0
    %8 = vsyncpa [#allocation3], 0
    %s9 = scalar_lea.sflag [#allocation3], 1
    %10 = vsyncpa %s9, 0
    loop: start=0, step=1, limit=4
    $region2: #{tpu_custom_call.1} parent=1 // loop_pre_header
      _
    $region3: #{tpu_custom_call.1} parent=1 // loop_header
      %s12 = sphi 0, %s16
      %p13 = scmp.ge.s32.totalorder %s12, 4
      %s20 = sphi 0, %s20
      %s22 = sphi 0, %s20
      %s23 = sphi 0, %s22
      %s37 = sphi 0, %s23
      %s43 = sphi 0, %s45
      %s46 = sphi 0, %s43
      %s47 = sphi 0, %s46
      %s63 = sphi 0, %s47
      %s69 = sphi 0, %s71
      %s72 = sphi 0, %s69
      %s73 = sphi 0, %s72
      %s89 = sphi 0, %s73
    $region4: #{tpu_custom_call.1} parent=1 // loop_header_branch
      %15 = sbr.rel (%p13) target = $region8
    $region5: #{tpu_custom_call.1} parent=1 // loop_body
      %s17 = ssub.s32 %s12, 1
      %s18 = ssub.s32 %s12, 2
      %s19 = sadd.s32 %s12, 1
      %s21 = sadd.s32 %s20, 1
      %p24 = scmp.eq.s32.totalorder %s12, 1
      %p25 = scmp.ne.s32.totalorder %s20, %s22
      %p26 = scmp.eq.s32.totalorder %s12, 0
      %p27 = por %p25, %p26
      %p28 = scmp.ne.s32.totalorder %s20, %s22
      %p29 = scmp.eq.s32.totalorder %s17, 1
      %p30 = por %p28, %p29
      %p31 = scmp.ne.s32.totalorder %s22, %s23
      %p32 = scmp.eq.s32.totalorder %s17, 0
      %p33 = por %p31, %p32
      %p34 = scmp.ne.s32.totalorder %s22, %s23
      %p35 = scmp.eq.s32.totalorder %s18, 1
      %p36 = por %p34, %p35
      %p38 = scmp.ne.s32.totalorder %s23, %s37
      %p39 = scmp.eq.s32.totalorder %s18, 0
      %p40 = por %p38, %p39
      %s41 = ssub.s32 %s12, %s19
      %p42 = scmp.eq.s32.totalorder %s41, 0
      %s44 = sadd.s32 %s43, 1
      %s45 = scalar_select %p42, %s43, %s44
      %p48 = pneg %p42
      %p49 = scmp.eq.s32.totalorder %s12, 1
      %p50 = por %p48, %p49
      %p51 = scmp.ne.s32.totalorder %s43, %s46
      %p52 = scmp.eq.s32.totalorder %s12, 0
      %p53 = por %p51, %p52
      %p54 = scmp.ne.s32.totalorder %s43, %s46
      %p55 = scmp.eq.s32.totalorder %s17, 1
      %p56 = por %p54, %p55
      %p57 = scmp.ne.s32.totalorder %s46, %s47
      %p58 = scmp.eq.s32.totalorder %s17, 0
      %p59 = por %p57, %p58
      %p60 = scmp.ne.s32.totalorder %s46, %s47
      %p61 = scmp.eq.s32.totalorder %s18, 1
      %p62 = por %p60, %p61
      %p64 = scmp.ne.s32.totalorder %s47, %s63
      %p65 = scmp.eq.s32.totalorder %s18, 0
      %p66 = por %p64, %p65
      %s67 = ssub.s32 %s12, %s19
      %p68 = scmp.eq.s32.totalorder %s67, 0
      %s70 = sadd.s32 %s69, 1
      %s71 = scalar_select %p68, %s69, %s70
      %p74 = pneg %p68
      %p75 = scmp.eq.s32.totalorder %s12, 1
      %p76 = por %p74, %p75
      %p77 = scmp.ne.s32.totalorder %s69, %s72
      %p78 = scmp.eq.s32.totalorder %s12, 0
      %p79 = por %p77, %p78
      %p80 = scmp.ne.s32.totalorder %s69, %s72
      %p81 = scmp.eq.s32.totalorder %s17, 1
      %p82 = por %p80, %p81
      %p83 = scmp.ne.s32.totalorder %s72, %s73
      %p84 = scmp.eq.s32.totalorder %s17, 0
      %p85 = por %p83, %p84
      %p86 = scmp.ne.s32.totalorder %s72, %s73
      %p87 = scmp.eq.s32.totalorder %s18, 1
      %p88 = por %p86, %p87
      %p90 = scmp.ne.s32.totalorder %s73, %s89
      %p91 = scmp.eq.s32.totalorder %s18, 0
      %p92 = por %p90, %p91
      %p93 = scmp.le.s32.totalorder 1, %s12
      %p94 = scmp.lt.s32.totalorder %s12, 3
      %p95 = pnand %p93, %p94
      %p96 = pneg %p95
      // Predicated region
      $region9: #{tpu_custom_call.1} parent=5 // pred_check
        _
      $region10: #{tpu_custom_call.1} parent=5 // pred_check_branch
        %98 = sbr.rel (%p95) target = $region12
      $region11: #{tpu_custom_call.1} parent=5 // pred_region
        %s99 = ssub.s32 %s12, 1
        // Predicated region
        $region13: #{tpu_custom_call.1} parent=11 // pred_check
          %p100 = pneg %p33
        $region14: #{tpu_custom_call.1} parent=11 // pred_check_branch
          %102 = sbr.rel (%p100) target = $region16
        $region15: #{tpu_custom_call.1} parent=11 // pred_region
          %s104 = ssub.s32 16, 16
          %105 = vsyncadd [#allocation4], %s104
          %108 = dma.hbm_to_smem %s0, 16, [#allocation2], [#allocation4]
        $region16: #{tpu_custom_call.1} parent=11 // pred_fallthru
          _
      $region12: #{tpu_custom_call.1} parent=5 // pred_fallthru
        _
      %p109 = scmp.lt.s32.totalorder %s12, 2
      // Predicated region
      $region17: #{tpu_custom_call.1} parent=5 // pred_check
        %p110 = pneg %p109
      $region18: #{tpu_custom_call.1} parent=5 // pred_check_branch
        %112 = sbr.rel (%p110) target = $region20
      $region19: #{tpu_custom_call.1} parent=5 // pred_region
        // Predicated region
        $region21: #{tpu_custom_call.1} parent=19 // pred_check
          %p113 = pneg %p53
        $region22: #{tpu_custom_call.1} parent=19 // pred_check_branch
          %115 = sbr.rel (%p113) target = $region24
        $region23: #{tpu_custom_call.1} parent=19 // pred_region
          %s116 = sand.u32 %s43, 1
          %s117 = scalar_lea.sflag [#allocation3], %s116
          %s118 = sand.u32 %s43, 1
          %s119 = smul.addr %s118, 8
          %s120 = scalar_lea.vmem [#allocation5], %s119
          %s121 = smul.u32 2, %s12
          %s123 = ssub.s32 128, 128
          %124 = vsyncadd %s117, %s123
          %s125 = smul.addr %s121, 4
          %s126 = smul.addr %s125, 16
          %s127 = scalar_lea.hbm %s1, %s126
          %s128 = sshll.u32 %s120, 4
          %s129 = int_to_ptr.vmem [resolvable:$true] %s128
          %134 = dma.hbm_to_vmem [thread:$0]  %s127, 128, %s129, %s117, 64, 64, 4
        $region24: #{tpu_custom_call.1} parent=19 // pred_fallthru
          _
      $region20: #{tpu_custom_call.1} parent=5 // pred_fallthru
        _
      %p135 = scmp.le.s32.totalorder 1, %s12
      %p136 = scmp.lt.s32.totalorder %s12, 3
      %p137 = pnand %p135, %p136
      %p138 = pneg %p137
      // Predicated region
      $region25: #{tpu_custom_call.1} parent=5 // pred_check
        _
      $region26: #{tpu_custom_call.1} parent=5 // pred_check_branch
        %140 = sbr.rel (%p137) target = $region28
      $region27: #{tpu_custom_call.1} parent=5 // pred_region
        %s141 = ssub.s32 %s12, 1
        // Predicated region
        $region29: #{tpu_custom_call.1} parent=27 // pred_check
          %p142 = pneg %p33
        $region30: #{tpu_custom_call.1} parent=27 // pred_check_branch
          %144 = sbr.rel (%p142) target = $region32
        $region31: #{tpu_custom_call.1} parent=27 // pred_region
          %145 = dma.done [#allocation4], 16
        $region32: #{tpu_custom_call.1} parent=27 // pred_fallthru
          _
        %s146 = sand.u32 %s46, 1
        %s147 = scalar_lea.sflag [#allocation3], %s146
        %s148 = sand.u32 %s46, 1
        %s149 = smul.addr %s148, 8
        %s150 = scalar_lea.vmem [#allocation5], %s149
        // Predicated region
        $region33: #{tpu_custom_call.1} parent=27 // pred_check
          %p151 = pneg %p59
        $region34: #{tpu_custom_call.1} parent=27 // pred_check_branch
          %153 = sbr.rel (%p151) target = $region36
        $region35: #{tpu_custom_call.1} parent=27 // pred_region
          %154 = dma.done %s147, 128
        $region36: #{tpu_custom_call.1} parent=27 // pred_fallthru
          _
        %155 = sfence
        %p156 = pneg %p33
        %p157 = pneg %p30
        %s158 = sand.u32 %s46, 1
        %s159 = scalar_lea.sflag [#allocation3], %s158
        %s160 = sand.u32 %s46, 1
        %s161 = smul.addr %s160, 8
        %s162 = scalar_lea.vmem [#allocation5], %s161
        %p163 = pneg %p59
        %p164 = pneg %p56
        %p165 = pneg %p85
        %p166 = pneg %p82
        %s167 = smul.u32 2, %s17
        %p168 = scmp.lt.s32.totalorder %s167, 3
        %s169 = scalar_select %p168, %s167, 3
        %s170 = smul.addr %s169, 3
        %s171 = smul.addr %s170, 4
        %s172 = scalar_lea.vmem %s2, %s171
        %s173 = smul.u32 2, %s17
        %s174 = smul.u32 2, %s17
        %p175 = scmp.lt.s32.totalorder %s174, 3
        %s176 = scalar_select %p175, %s174, 3
        %s177 = smul.addr %s176, 3
        %s178 = smul.addr %s177, 4
        %s179 = scalar_lea.vmem %s2, %s178
        %s180 = smul.u32 2, %s17
        %v181 = vld [vmem:[%s150] sm:$0xf]
        %v182 = vld [vmem:[%s150 + $0x4] sm:$0xf]
        %s183 = sld [smem:[#allocation2]]
        %v184 = vstv %s183
        %v185 = vmul.f32 %v184, %v181
        %v186 = vmul.f32 %v184, %v182
        %s187 = sld [smem:[#allocation2 + $0x9]]
        %v188 = vstv %s187
        %v189 = vmul.f32 %v188, %v181
        %v190 = vmul.f32 %v188, %v182
        %s191 = sld [smem:[#allocation2 + $0x12]]
        %v192 = vstv %s191
        %v193 = vmul.f32 %v192, %v181
        %v194 = vmul.f32 %v192, %v182
        %s195 = sld [smem:[#allocation2 + $0x1]]
        %v196 = vstv %s195
        %v197 = vmul.f32 %v196, %v181
        %v198 = vmul.f32 %v196, %v182
        %201 = vrot.lane.b32.xlu0 %v197, 127
        %v202 = vpop.permute.xlu0 %201
        %203 = vrot.lane.b32.xlu0 %v198, 127
        %v204 = vpop.permute.xlu0 %203
        %v205 = vrot.slane %v202, 1
        %v206 = vrot.slane %v204, 1
        %vm207 = vcmask 1039360
        %v208 = vsel %vm207, %v202, %v205
        %v209 = vsel %vm207, %v204, %v206
        %v212 = vadd.f32 %v185, %v208
        %v213 = vadd.f32 %v186, %v209
        %s214 = sld [smem:[#allocation2 + $0xa]]
        %v215 = vstv %s214
        %v216 = vmul.f32 %v215, %v181
        %v217 = vmul.f32 %v215, %v182
        %220 = vrot.lane.b32.xlu0 %v216, 127
        %v221 = vpop.permute.xlu0 %220
        %222 = vrot.lane.b32.xlu0 %v217, 127
        %v223 = vpop.permute.xlu0 %222
        %v224 = vrot.slane %v221, 1
        %v225 = vrot.slane %v223, 1
        %v226 = vsel %vm207, %v221, %v224
        %v227 = vsel %vm207, %v223, %v225
        %v230 = vadd.f32 %v189, %v226
        %v231 = vadd.f32 %v190, %v227
        %s232 = sld [smem:[#allocation2 + $0x13]]
        %v233 = vstv %s232
        %v234 = vmul.f32 %v233, %v181
        %v235 = vmul.f32 %v233, %v182
        %238 = vrot.lane.b32.xlu0 %v234, 127
        %v239 = vpop.permute.xlu0 %238
        %240 = vrot.lane.b32.xlu0 %v235, 127
        %v241 = vpop.permute.xlu0 %240
        %v242 = vrot.slane %v239, 1
        %v243 = vrot.slane %v241, 1
        %v244 = vsel %vm207, %v239, %v242
        %v245 = vsel %vm207, %v241, %v243
        %v248 = vadd.f32 %v193, %v244
        %v249 = vadd.f32 %v194, %v245
        %s250 = sld [smem:[#allocation2 + $0x2]]
        %v251 = vstv %s250
        %v252 = vmul.f32 %v251, %v181
        %v253 = vmul.f32 %v251, %v182
        %256 = vrot.lane.b32.xlu0 %v252, 126
        %v257 = vpop.permute.xlu0 %256
        %258 = vrot.lane.b32.xlu0 %v253, 126
        %v259 = vpop.permute.xlu0 %258
        %v260 = vrot.slane %v257, 1
        %v261 = vrot.slane %v259, 1
        %vm262 = vcmask 1031168
        %v263 = vsel %vm262, %v257, %v260
        %v264 = vsel %vm262, %v259, %v261
        %v267 = vadd.f32 %v212, %v263
        %v268 = vadd.f32 %v213, %v264
        %s269 = sld [smem:[#allocation2 + $0xb]]
        %v270 = vstv %s269
        %v271 = vmul.f32 %v270, %v181
        %v272 = vmul.f32 %v270, %v182
        %275 = vrot.lane.b32.xlu0 %v271, 126
        %v276 = vpop.permute.xlu0 %275
        %277 = vrot.lane.b32.xlu0 %v272, 126
        %v278 = vpop.permute.xlu0 %277
        %v279 = vrot.slane %v276, 1
        %v280 = vrot.slane %v278, 1
        %v281 = vsel %vm262, %v276, %v279
        %v282 = vsel %vm262, %v278, %v280
        %v285 = vadd.f32 %v230, %v281
        %v286 = vadd.f32 %v231, %v282
        %s287 = sld [smem:[#allocation2 + $0x14]]
        %v288 = vstv %s287
        %v289 = vmul.f32 %v288, %v181
        %v290 = vmul.f32 %v288, %v182
        %293 = vrot.lane.b32.xlu0 %v289, 126
        %v294 = vpop.permute.xlu0 %293
        %295 = vrot.lane.b32.xlu0 %v290, 126
        %v296 = vpop.permute.xlu0 %295
        %v297 = vrot.slane %v294, 1
        %v298 = vrot.slane %v296, 1
        %v299 = vsel %vm262, %v294, %v297
        %v300 = vsel %vm262, %v296, %v298
        %v303 = vadd.f32 %v248, %v299
        %v304 = vadd.f32 %v249, %v300
        %s305 = sld [smem:[#allocation2 + $0x3]]
        %v306 = vstv %s305
        %v307 = vmul.f32 %v306, %v181
        %v308 = vmul.f32 %v306, %v182
        %311 = vrot.lane.b32.xlu0 %v307, 108
        %v312 = vpop.permute.xlu0 %311
        %313 = vrot.lane.b32.xlu0 %v308, 108
        %v314 = vpop.permute.xlu0 %313
        %v315 = vrot.slane %v312, 1
        %v316 = vrot.slane %v314, 1
        %vm317 = vcmask 883712
        %v318 = vsel %vm317, %v312, %v315
        %v319 = vsel %vm317, %v314, %v316
        %v322 = vadd.f32 %v267, %v318
        %v323 = vadd.f32 %v268, %v319
        %s324 = sld [smem:[#allocation2 + $0xc]]
        %v325 = vstv %s324
        %v326 = vmul.f32 %v325, %v181
        %v327 = vmul.f32 %v325, %v182
        %330 = vrot.lane.b32.xlu0 %v326, 108
        %v331 = vpop.permute.xlu0 %330
        %332 = vrot.lane.b32.xlu0 %v327, 108
        %v333 = vpop.permute.xlu0 %332
        %v334 = vrot.slane %v331, 1
        %v335 = vrot.slane %v333, 1
        %v336 = vsel %vm317, %v331, %v334
        %v337 = vsel %vm317, %v333, %v335
        %v340 = vadd.f32 %v285, %v336
        %v341 = vadd.f32 %v286, %v337
        %s342 = sld [smem:[#allocation2 + $0x15]]
        %v343 = vstv %s342
        %v344 = vmul.f32 %v343, %v181
        %v345 = vmul.f32 %v343, %v182
        %348 = vrot.lane.b32.xlu0 %v344, 108
        %v349 = vpop.permute.xlu0 %348
        %350 = vrot.lane.b32.xlu0 %v345, 108
        %v351 = vpop.permute.xlu0 %350
        %v352 = vrot.slane %v349, 1
        %v353 = vrot.slane %v351, 1
        %v354 = vsel %vm317, %v349, %v352
        %v355 = vsel %vm317, %v351, %v353
        %v358 = vadd.f32 %v303, %v354
        %v359 = vadd.f32 %v304, %v355
        %s360 = sld [smem:[#allocation2 + $0x4]]
        %v361 = vstv %s360
        %v362 = vmul.f32 %v361, %v181
        %v363 = vmul.f32 %v361, %v182
        %366 = vrot.lane.b32.xlu0 %v362, 107
        %v367 = vpop.permute.xlu0 %366
        %368 = vrot.lane.b32.xlu0 %v363, 107
        %v369 = vpop.permute.xlu0 %368
        %v370 = vrot.slane %v367, 1
        %v371 = vrot.slane %v369, 1
        %vm372 = vcmask 875520
        %v373 = vsel %vm372, %v367, %v370
        %v374 = vsel %vm372, %v369, %v371
        %v377 = vadd.f32 %v322, %v373
        %v378 = vadd.f32 %v323, %v374
        %s379 = sld [smem:[#allocation2 + $0xd]]
        %v380 = vstv %s379
        %v381 = vmul.f32 %v380, %v181
        %v382 = vmul.f32 %v380, %v182
        %385 = vrot.lane.b32.xlu0 %v381, 107
        %v386 = vpop.permute.xlu0 %385
        %387 = vrot.lane.b32.xlu0 %v382, 107
        %v388 = vpop.permute.xlu0 %387
        %v389 = vrot.slane %v386, 1
        %v390 = vrot.slane %v388, 1
        %v391 = vsel %vm372, %v386, %v389
        %v392 = vsel %vm372, %v388, %v390
        %v395 = vadd.f32 %v340, %v391
        %v396 = vadd.f32 %v341, %v392
        %s397 = sld [smem:[#allocation2 + $0x16]]
        %v398 = vstv %s397
        %v399 = vmul.f32 %v398, %v181
        %v400 = vmul.f32 %v398, %v182
        %403 = vrot.lane.b32.xlu0 %v399, 107
        %v404 = vpop.permute.xlu0 %403
        %405 = vrot.lane.b32.xlu0 %v400, 107
        %v406 = vpop.permute.xlu0 %405
        %v407 = vrot.slane %v404, 1
        %v408 = vrot.slane %v406, 1
        %v409 = vsel %vm372, %v404, %v407
        %v410 = vsel %vm372, %v406, %v408
        %v413 = vadd.f32 %v358, %v409
        %v414 = vadd.f32 %v359, %v410
        %s415 = sld [smem:[#allocation2 + $0x5]]
        %v416 = vstv %s415
        %v417 = vmul.f32 %v416, %v181
        %v418 = vmul.f32 %v416, %v182
        %421 = vrot.lane.b32.xlu0 %v417, 106
        %v422 = vpop.permute.xlu0 %421
        %423 = vrot.lane.b32.xlu0 %v418, 106
        %v424 = vpop.permute.xlu0 %423
        %v425 = vrot.slane %v422, 1
        %v426 = vrot.slane %v424, 1
        %vm427 = vcmask 867328
        %v428 = vsel %vm427, %v422, %v425
        %v429 = vsel %vm427, %v424, %v426
        %v432 = vadd.f32 %v377, %v428
        %v433 = vadd.f32 %v378, %v429
        %s434 = sld [smem:[#allocation2 + $0xe]]
        %v435 = vstv %s434
        %v436 = vmul.f32 %v435, %v181
        %v437 = vmul.f32 %v435, %v182
        %440 = vrot.lane.b32.xlu0 %v436, 106
        %v441 = vpop.permute.xlu0 %440
        %442 = vrot.lane.b32.xlu0 %v437, 106
        %v443 = vpop.permute.xlu0 %442
        %v444 = vrot.slane %v441, 1
        %v445 = vrot.slane %v443, 1
        %v446 = vsel %vm427, %v441, %v444
        %v447 = vsel %vm427, %v443, %v445
        %v450 = vadd.f32 %v395, %v446
        %v451 = vadd.f32 %v396, %v447
        %s452 = sld [smem:[#allocation2 + $0x17]]
        %v453 = vstv %s452
        %v454 = vmul.f32 %v453, %v181
        %v455 = vmul.f32 %v453, %v182
        %458 = vrot.lane.b32.xlu0 %v454, 106
        %v459 = vpop.permute.xlu0 %458
        %460 = vrot.lane.b32.xlu0 %v455, 106
        %v461 = vpop.permute.xlu0 %460
        %v462 = vrot.slane %v459, 1
        %v463 = vrot.slane %v461, 1
        %v464 = vsel %vm427, %v459, %v462
        %v465 = vsel %vm427, %v461, %v463
        %v468 = vadd.f32 %v413, %v464
        %v469 = vadd.f32 %v414, %v465
        %s470 = sld [smem:[#allocation2 + $0x6]]
        %v471 = vstv %s470
        %v472 = vmul.f32 %v471, %v181
        %v473 = vmul.f32 %v471, %v182
        %476 = vrot.lane.b32.xlu0 %v472, 88
        %v477 = vpop.permute.xlu0 %476
        %478 = vrot.lane.b32.xlu0 %v473, 88
        %v479 = vpop.permute.xlu0 %478
        %v480 = vrot.slane %v477, 1
        %v481 = vrot.slane %v479, 1
        %vm482 = vcmask 719872
        %v483 = vsel %vm482, %v477, %v480
        %v484 = vsel %vm482, %v479, %v481
        %v487 = vadd.f32 %v432, %v483
        %v488 = vadd.f32 %v433, %v484
        %s489 = sld [smem:[#allocation2 + $0xf]]
        %v490 = vstv %s489
        %v491 = vmul.f32 %v490, %v181
        %v492 = vmul.f32 %v490, %v182
        %495 = vrot.lane.b32.xlu0 %v491, 88
        %v496 = vpop.permute.xlu0 %495
        %497 = vrot.lane.b32.xlu0 %v492, 88
        %v498 = vpop.permute.xlu0 %497
        %v499 = vrot.slane %v496, 1
        %v500 = vrot.slane %v498, 1
        %v501 = vsel %vm482, %v496, %v499
        %v502 = vsel %vm482, %v498, %v500
        %v505 = vadd.f32 %v450, %v501
        %v506 = vadd.f32 %v451, %v502
        %s507 = sld [smem:[#allocation2 + $0x18]]
        %v508 = vstv %s507
        %v509 = vmul.f32 %v508, %v181
        %v510 = vmul.f32 %v508, %v182
        %513 = vrot.lane.b32.xlu0 %v509, 88
        %v514 = vpop.permute.xlu0 %513
        %515 = vrot.lane.b32.xlu0 %v510, 88
        %v516 = vpop.permute.xlu0 %515
        %v517 = vrot.slane %v514, 1
        %v518 = vrot.slane %v516, 1
        %v519 = vsel %vm482, %v514, %v517
        %v520 = vsel %vm482, %v516, %v518
        %v523 = vadd.f32 %v468, %v519
        %v524 = vadd.f32 %v469, %v520
        %s525 = sld [smem:[#allocation2 + $0x7]]
        %v526 = vstv %s525
        %v527 = vmul.f32 %v526, %v181
        %v528 = vmul.f32 %v526, %v182
        %531 = vrot.lane.b32.xlu0 %v527, 87
        %v532 = vpop.permute.xlu0 %531
        %533 = vrot.lane.b32.xlu0 %v528, 87
        %v534 = vpop.permute.xlu0 %533
        %v535 = vrot.slane %v532, 1
        %v536 = vrot.slane %v534, 1
        %vm537 = vcmask 711680
        %v538 = vsel %vm537, %v532, %v535
        %v539 = vsel %vm537, %v534, %v536
        %v542 = vadd.f32 %v487, %v538
        %v543 = vadd.f32 %v488, %v539
        %s544 = sld [smem:[#allocation2 + $0x10]]
        %v545 = vstv %s544
        %v546 = vmul.f32 %v545, %v181
        %v547 = vmul.f32 %v545, %v182
        %550 = vrot.lane.b32.xlu0 %v546, 87
        %v551 = vpop.permute.xlu0 %550
        %552 = vrot.lane.b32.xlu0 %v547, 87
        %v553 = vpop.permute.xlu0 %552
        %v554 = vrot.slane %v551, 1
        %v555 = vrot.slane %v553, 1
        %v556 = vsel %vm537, %v551, %v554
        %v557 = vsel %vm537, %v553, %v555
        %v560 = vadd.f32 %v505, %v556
        %v561 = vadd.f32 %v506, %v557
        %s562 = sld [smem:[#allocation2 + $0x19]]
        %v563 = vstv %s562
        %v564 = vmul.f32 %v563, %v181
        %v565 = vmul.f32 %v563, %v182
        %568 = vrot.lane.b32.xlu0 %v564, 87
        %v569 = vpop.permute.xlu0 %568
        %570 = vrot.lane.b32.xlu0 %v565, 87
        %v571 = vpop.permute.xlu0 %570
        %v572 = vrot.slane %v569, 1
        %v573 = vrot.slane %v571, 1
        %v574 = vsel %vm537, %v569, %v572
        %v575 = vsel %vm537, %v571, %v573
        %v578 = vadd.f32 %v523, %v574
        %v579 = vadd.f32 %v524, %v575
        %s580 = sld [smem:[#allocation2 + $0x8]]
        %v581 = vstv %s580
        %v582 = vmul.f32 %v581, %v181
        %v583 = vmul.f32 %v581, %v182
        %586 = vrot.lane.b32.xlu0 %v582, 86
        %v587 = vpop.permute.xlu0 %586
        %588 = vrot.lane.b32.xlu0 %v583, 86
        %v589 = vpop.permute.xlu0 %588
        %v590 = vrot.slane %v587, 1
        %v591 = vrot.slane %v589, 1
        %vm592 = vcmask 703488
        %v593 = vsel %vm592, %v587, %v590
        %v594 = vsel %vm592, %v589, %v591
        %v597 = vadd.f32 %v542, %v593
        %v598 = vadd.f32 %v543, %v594
        %s599 = sld [smem:[#allocation2 + $0x11]]
        %v600 = vstv %s599
        %v601 = vmul.f32 %v600, %v181
        %v602 = vmul.f32 %v600, %v182
        %605 = vrot.lane.b32.xlu0 %v601, 86
        %v606 = vpop.permute.xlu0 %605
        %607 = vrot.lane.b32.xlu0 %v602, 86
        %v608 = vpop.permute.xlu0 %607
        %v609 = vrot.slane %v606, 1
        %v610 = vrot.slane %v608, 1
        %v611 = vsel %vm592, %v606, %v609
        %v612 = vsel %vm592, %v608, %v610
        %v615 = vadd.f32 %v560, %v611
        %v616 = vadd.f32 %v561, %v612
        %s617 = sld [smem:[#allocation2 + $0x1a]]
        %v618 = vstv %s617
        %v619 = vmul.f32 %v618, %v181
        %v620 = vmul.f32 %v618, %v182
        %623 = vrot.lane.b32.xlu0 %v619, 86
        %v624 = vpop.permute.xlu0 %623
        %625 = vrot.lane.b32.xlu0 %v620, 86
        %v626 = vpop.permute.xlu0 %625
        %v627 = vrot.slane %v624, 1
        %v628 = vrot.slane %v626, 1
        %v629 = vsel %vm592, %v624, %v627
        %v630 = vsel %vm592, %v626, %v628
        %v633 = vadd.f32 %v578, %v629
        %v634 = vadd.f32 %v579, %v630
        %v635 = vxor.u32 %v597, 2147483648
        %v636 = vxor.u32 %v598, 2147483648
        %v637 = vmul.f32 %v635, 1.442695
        %v638 = vpow.pop %v637
        %v639 = vmul.f32 %v636, 1.442695
        %v640 = vpow.pop %v639
        %v641 = vadd.f32 %v638, 1.0
        %v642 = vadd.f32 %v640, 1.0
        %v643 = vrcp.pop %v641
        %v644 = vmul.f32 1.0, %v643
        %v645 = vrcp.pop %v642
        %v646 = vmul.f32 1.0, %v645
        %v647 = vmul.f32 %v597, %v644
        %v648 = vmul.f32 %v598, %v646
        %v649 = vlaneseq
        %vm650 = vcmp.ge.s32.totalorder %v649, 0
        %vm651 = vcmp.lt.s32.totalorder %v649, 360
        %vm652 = vmand %vm650, %vm651
        %653 = vst.msk [vmem:[%s179] ss:$4 sm:$0x7] %vm652, %v647
        %s654 = scalar_lea.vmem %s179, 12
        %655 = vst.msk [vmem:[%s654] ss:$4 sm:$0x7] %vm652, %v648
        %v656 = vxor.u32 %v615, 2147483648
        %v657 = vxor.u32 %v616, 2147483648
        %v658 = vmul.f32 %v656, 1.442695
        %v659 = vpow.pop %v658
        %v660 = vmul.f32 %v657, 1.442695
        %v661 = vpow.pop %v660
        %v662 = vadd.f32 %v659, 1.0
        %v663 = vadd.f32 %v661, 1.0
        %v664 = vrcp.pop %v662
        %v665 = vmul.f32 1.0, %v664
        %v666 = vrcp.pop %v663
        %v667 = vmul.f32 1.0, %v666
        %v668 = vmul.f32 %v615, %v665
        %v669 = vmul.f32 %v616, %v667
        %s670 = scalar_lea.vmem %s179, 1
        %671 = vst.msk [vmem:[%s670] ss:$4 sm:$0x7] %vm652, %v668
        %s672 = scalar_lea.vmem %s179, 13
        %673 = vst.msk [vmem:[%s672] ss:$4 sm:$0x7] %vm652, %v669
        %v674 = vxor.u32 %v633, 2147483648
        %v675 = vxor.u32 %v634, 2147483648
        %v676 = vmul.f32 %v674, 1.442695
        %v677 = vpow.pop %v676
        %v678 = vmul.f32 %v675, 1.442695
        %v679 = vpow.pop %v678
        %v680 = vadd.f32 %v677, 1.0
        %v681 = vadd.f32 %v679, 1.0
        %v682 = vrcp.pop %v680
        %v683 = vmul.f32 1.0, %v682
        %v684 = vrcp.pop %v681
        %v685 = vmul.f32 1.0, %v684
        %v686 = vmul.f32 %v633, %v683
        %v687 = vmul.f32 %v634, %v685
        %s688 = scalar_lea.vmem %s179, 2
        %689 = vst.msk [vmem:[%s688] ss:$4 sm:$0x7] %vm652, %v686
        %s690 = scalar_lea.vmem %s179, 14
        %691 = vst.msk [vmem:[%s690] ss:$4 sm:$0x7] %vm652, %v687
        %s692 = smul.u32 2, %s17
        %p693 = scmp.lt.s32.totalorder %s692, 3
        %s694 = scalar_select %p693, %s692, 3
        %s695 = smul.addr %s694, 3
        %s696 = smul.addr %s695, 4
        %s697 = scalar_lea.vmem %s2, %s696
        // Predicated region
        $region37: #{tpu_custom_call.1} parent=27 // pred_check
          %p698 = pneg %p82
        $region38: #{tpu_custom_call.1} parent=27 // pred_check_branch
          %700 = sbr.rel (%p698) target = $region40
        $region39: #{tpu_custom_call.1} parent=27 // pred_region
          %s701 = smul.u32 2, %s17
        $region40: #{tpu_custom_call.1} parent=27 // pred_fallthru
          _
      $region28: #{tpu_custom_call.1} parent=5 // pred_fallthru
        _
      %p702 = scmp.le.s32.totalorder 2, %s12
      // Predicated region
      $region41: #{tpu_custom_call.1} parent=5 // pred_check
        %p703 = pneg %p702
      $region42: #{tpu_custom_call.1} parent=5 // pred_check_branch
        %705 = sbr.rel (%p703) target = $region44
      $region43: #{tpu_custom_call.1} parent=5 // pred_region
        %s706 = ssub.s32 %s12, 2
        // Predicated region
        $region45: #{tpu_custom_call.1} parent=43 // pred_check
          %p707 = pneg %p88
        $region46: #{tpu_custom_call.1} parent=43 // pred_check_branch
          %709 = sbr.rel (%p707) target = $region48
        $region47: #{tpu_custom_call.1} parent=43 // pred_region
          %s710 = smul.u32 2, %s18
          %p711 = scmp.lt.s32.totalorder %s710, 3
          %s712 = scalar_select %p711, %s710, 3
          %s713 = smul.addr %s712, 3
          %s714 = smul.addr %s713, 4
          %s715 = scalar_lea.vmem %s2, %s714
        $region48: #{tpu_custom_call.1} parent=43 // pred_fallthru
          _
      $region44: #{tpu_custom_call.1} parent=5 // pred_fallthru
        _
    $region6: #{tpu_custom_call.1} parent=1 // loop_footer
      %s16 = sadd.s32 1, %s12
    $region7: #{tpu_custom_call.1} parent=1 // loop_footer_branch
      %11 = sbr.rel target = $region3
    $region8: #{tpu_custom_call.1} parent=1 // loop_exit
      _
    %716 = vsyncpa [#allocation3], 1
    %s717 = scalar_lea.sflag [#allocation3], 1
    %718 = vsyncpa %s717, 1
    %719 = vsyncpa [#allocation4], 1
    %s720 = scalar_lea.sflag [#allocation4], 1
    %721 = vsyncpa %s720, 1

</llo_original>
